<compile_context>
chip_gen: v5e
topology: v5e:2x2
jax: 0.10.0
libtpu: 0.0.40
codegen_flags: <defaults>
</compile_context>

<pallas_src>
import jax
import jax.numpy as jnp
from jax import lax
from jax.experimental import pallas as pl
from jax.experimental.pallas import tpu as pltpu

_LN_EPS = 1e-5  # torch.nn.LayerNorm default eps


def _round_up(x, m):
    return (x + m - 1) // m * m


def _vmem_cap_bytes():
    """80% of physical VMEM (leave headroom for compiler scratch)."""
    try:
        return int(0.8 * pltpu.get_tpu_info().vmem_capacity_bytes)
    except Exception:
        return 48 * 2**20  # conservative default; fits v7x's 64 MiB/TC


def _resident_spec(shape):
    """Full-array block, constant index map -> stays resident across grid steps.

    Buffered(1): these blocks never change, so double-buffering them only
    doubles their VMEM footprint.
    """
    index_map = lambda i: (0,) * len(shape)
    try:
        return pl.BlockSpec(shape, index_map, pipeline_mode=pl.Buffered(1))
    except Exception:  # older jax without pipeline_mode on BlockSpec
        return pl.BlockSpec(shape, index_map)


def _choose_tile_b(B):
    b16 = _round_up(B, 16)  # bf16 sublane multiple
    if B >= 512:
        tile = 256          # taller M for the 256x256 MXU on v6e/v7x
    elif B >= 128:
        tile = 128
    else:
        tile = b16
    if b16 >= 32:
        # Guarantee >= 2 grid steps so ("parallel",) can shard the batch
        # across v7x's two TensorCores; costs nothing on single-TC v5e/v6e.
        tile = min(tile, _round_up((b16 + 1) // 2, 16))
    return max(16, tile)


def _make_mlp_kernel(num_layer, hidden_real, hidden_pad, act_pad):
    """[Linear -> LayerNorm -> ReLU] x num_layer -> Linear -> Tanh, fused."""
    pad_cols = float(hidden_pad - hidden_real)
    inv_h = 1.0 / float(hidden_real)

    def kernel(*refs):
        x_ref = refs[0]
        o_ref = refs[-1]
        w_refs = refs[1:1 + num_layer]
        w_out_ref = refs[1 + num_layer]
        vec_ref = refs[2 + num_layer]  # stacked (3L+1, vec_p) f32 bank

        h = x_ref[...]  # bf16 (tile_b, in_pad)
        for l in range(num_layer):
            b = vec_ref[3 * l + 0:3 * l + 1, :hidden_pad]
            g = vec_ref[3 * l + 1:3 * l + 2, :hidden_pad]
            beta = vec_ref[3 * l + 2:3 * l + 3, :hidden_pad]
            # Linear: bf16 operands on the MXU, f32 accumulation.
            z = jnp.dot(h, w_refs[l][...],
                        preferred_element_type=jnp.float32) + b
            # LayerNorm over the true hidden_dim. Padded columns of z are
            # exactly 0 (zero-padded W/b), so the mean needs no mask; the
            # variance sum over the padded width over-counts pad_cols copies
            # of mean^2, which we subtract as a per-row scalar (two-pass form,
            # no full-width mask multiply).
            mean = jnp.sum(z, axis=-1, keepdims=True) * inv_h
            c = z - mean
            var = (jnp.sum(c * c, axis=-1, keepdims=True)
                   - pad_cols * mean * mean) * inv_h
            # Padded columns end up exactly 0 since gamma/beta are zero-padded.
            z = c * lax.rsqrt(var + _LN_EPS) * g + beta
            # Dropout is identity (p=0 default / eval). ReLU, cast for next MXU op.
            h = jnp.maximum(z, 0.0).astype(jnp.bfloat16)

        n_rows = 3 * num_layer + 1
        b_out = vec_ref[n_rows - 1:n_rows, :act_pad]
        out = jnp.dot(h, w_out_ref[...],
                      preferred_element_type=jnp.float32) + b_out
        # NOTE: batch-padded rows go through an LN of a constant (bias-only)
        # row and can saturate tanh to large-but-finite values; they are
        # sliced away in the wrapper, so this is benign by construction.
        o_ref[...] = jnp.tanh(out)

    return kernel


def prepare_policy_params(params):
    """One-time pad + bf16 cast of the policy-head params (hoisted off the
    per-step forward path)."""
    hidden_layers = params["hidden"]
    num_layer = len(hidden_layers)
    in_dim = hidden_layers[0]["w"].shape[0]
    hidden_dim = hidden_layers[0]["w"].shape[1]
    action_dim = params["w_out"].shape[1]

    in_p = _round_up(in_dim, 128)
    hid_p = _round_up(hidden_dim, 128)
    act_p = _round_up(action_dim, 128)
    vec_p = max(hid_p, act_p)

    ws, rows = [], []
    prev_p = in_p
    for layer in hidden_layers:
        w = layer["w"]
        ws.append(jnp.pad(w.astype(jnp.bfloat16),
                          ((0, prev_p - w.shape[0]), (0, hid_p - hidden_dim))))
        prev_p = hid_p
        for name in ("b", "gamma", "beta"):
            v = jnp.ravel(layer[name])
            rows.append(jnp.pad(v, (0, vec_p - v.shape[0])))
    w_out = jnp.pad(params["w_out"].astype(jnp.bfloat16),
                    ((0, hid_p - hidden_dim), (0, act_p - action_dim)))
    b_out = jnp.ravel(params["b_out"])
    rows.append(jnp.pad(b_out, (0, vec_p - b_out.shape[0])))
    vec_bank = jnp.stack(rows).astype(jnp.float32)  # (3L+1, vec_p)

    return dict(ws=ws, w_out=w_out, vec=vec_bank, num_layer=num_layer,
                in_dim=in_dim, hidden_dim=hidden_dim, action_dim=action_dim,
                in_p=in_p, hid_p=hid_p, act_p=act_p)


def bc_policy_head_forward(h, prepared, *, tile_b=None):
    """BcPolicy.policy forward on encoder features h: (B, repr_dim) f32."""
    B, in_dim = h.shape
    assert in_dim == prepared["in_dim"]
    num_layer = prepared["num_layer"]
    hidden_dim = prepared["hidden_dim"]
    action_dim = prepared["action_dim"]
    in_p, hid_p, act_p = prepared["in_p"], prepared["hid_p"], prepared["act_p"]

    if tile_b is None:
        tile_b = _choose_tile_b(B)
    else:
        tile_b = max(16, _round_up(tile_b, 16))
    b_p = _round_up(B, tile_b)

    # Only per-call data prep: pad + cast the (small) input features.
    x = jnp.pad(h.astype(jnp.bfloat16), ((0, b_p - B), (0, in_p - in_dim)))

    operands = [x] + list(prepared["ws"]) + [prepared["w_out"], prepared["vec"]]
    in_specs = [pl.BlockSpec((tile_b, in_p), lambda i: (i, 0))]
    in_specs += [_resident_spec(a.shape) for a in operands[1:]]

    # ---- scheduler hint ------------------------------------------------------
    flops = 2 * b_p * (in_p * hid_p
                       + (num_layer - 1) * hid_p * hid_p
                       + hid_p * act_p)
    bytes_in = sum(int(a.size) * a.dtype.itemsize for a in operands)
    bytes_out = b_p * act_p * 4
    cost = pl.CostEstimate(flops=int(flops),
                           transcendentals=int(b_p * (act_p + num_layer)),
                           bytes_accessed=int(bytes_in + bytes_out))

    # ---- explicit VMEM budget ------------------------------------------------
    weight_bytes = bytes_in - int(x.size) * x.dtype.itemsize  # single-buffered
    io_bytes = 2 * tile_b * (in_p * 2 + act_p * 4)            # double-buffered x/out tiles
    epi_bytes = 6 * tile_b * hid_p * 4                        # f32 LN/ReLU temporaries
    live = weight_bytes + io_bytes + epi_bytes
    cap = _vmem_cap_bytes()
    vmem_limit = int(min(cap, max(32 * 2**20, 2 * live)))
    # TODO(synk): for hidden dims whose resident weights exceed `cap`, stream
    # per-layer weights via memory_space=pl.ANY + manual double-buffered DMA
    # instead of shrinking tile_b.

    out = pl.pallas_call(
        _make_mlp_kernel(num_layer, hidden_dim, hid_p, act_p),
        grid=(b_p // tile_b,),
        in_specs=in_specs,
        out_specs=pl.BlockSpec((tile_b, act_p), lambda i: (i, 0)),
        out_shape=jax.ShapeDtypeStruct((b_p, act_p), jnp.float32),
        compiler_params=pltpu.CompilerParams(
            dimension_semantics=("parallel",),
            vmem_limit_bytes=vmem_limit),
        cost_estimate=cost,
    )(*operands)

    return out[:B, :action_dim]


# -----------------------------------------------------------------------------
# Parameter init matching nn.Linear (uniform +/- 1/sqrt(fan_in)) and
# nn.LayerNorm (gamma=1, beta=0) shapes of build_fc(..., layer_norm=True).
# Weights stored as (in_features, out_features) => x @ W + b.
# -----------------------------------------------------------------------------
def init_params(key, in_dim, hidden_dim, action_dim, num_layer):
    dims = [in_dim] + [hidden_dim] * num_layer
    hidden = []
    for i in range(num_layer):
        fan_in, fan_out = dims[i], dims[i + 1]
        key, kw, kb = jax.random.split(key, 3)
        bound = 1.0 / float(fan_in) ** 0.5
        hidden.append(dict(
            w=jax.random.uniform(kw, (fan_in, fan_out), jnp.float32, -bound, bound),
            b=jax.random.uniform(kb, (1, fan_out), jnp.float32, -bound, bound),
            gamma=jnp.ones((1, fan_out), jnp.float32),
            beta=jnp.zeros((1, fan_out), jnp.float32),
        ))
    key, kw, kb = jax.random.split(key, 3)
    bound = 1.0 / float(hidden_dim) ** 0.5
    return dict(
        hidden=hidden,
        w_out=jax.random.uniform(kw, (hidden_dim, action_dim), jnp.float32,
                                 -bound, bound),
        b_out=jax.random.uniform(kb, (1, action_dim), jnp.float32,
                                 -bound, bound),
    )


def _reference_forward(h, params):
    """Pure-JAX reference with the same bf16-matmul / f32-epilogue recipe.
    (bf16 MXU operands differ from torch's f32 nn.Linear; acceptable for
    inference — stated explicitly here.)"""
    x = h
    for layer in params["hidden"]:
        z = jnp.dot(x.astype(jnp.bfloat16), layer["w"].astype(jnp.bfloat16),
                    preferred_element_type=jnp.float32) + layer["b"]
        mean = jnp.mean(z, axis=-1, keepdims=True)
        var = jnp.mean((z - mean) ** 2, axis=-1, keepdims=True)
        z = (z - mean) * lax.rsqrt(var + _LN_EPS) * layer["gamma"] + layer["beta"]
        x = jnp.maximum(z, 0.0)
    out = jnp.dot(x.astype(jnp.bfloat16), params["w_out"].astype(jnp.bfloat16),
                  preferred_element_type=jnp.float32) + params["b_out"]
    return jnp.tanh(out)


if __name__ == "__main__":
    # Small shapes: encoder features -> 2 hidden layers -> 7-D action.
    batch, repr_dim, hidden_dim, action_dim, num_layer = 5, 80, 192, 7, 2

    key = jax.random.PRNGKey(0)
    key, k_h = jax.random.split(key)
    params = init_params(key, repr_dim, hidden_dim, action_dim, num_layer)
    h = jax.random.normal(k_h, (batch, repr_dim), jnp.float32)

    prepared = prepare_policy_params(params)  # one-time pad/cast (hoisted)
    mu = bc_policy_head_forward(h, prepared)
    mu = jax.block_until_ready(mu)

    ref = _reference_forward(h, params)
    assert mu.shape == (batch, action_dim)
    assert jnp.allclose(mu, ref, atol=5e-3, rtol=5e-3), "mismatch vs JAX reference"

    print("KERNEL_OK")
</pallas_src>

<mosaic_0001>
module attributes {stable_mosaic.version = 11 : i64} {
  func.func @kernel(%arg0: i32, %arg1: memref<16x128xbf16, #tpu.memory_space<vmem>>, %arg2: memref<128x256xbf16, #tpu.memory_space<vmem>>, %arg3: memref<256x256xbf16, #tpu.memory_space<vmem>>, %arg4: memref<256x128xbf16, #tpu.memory_space<vmem>>, %arg5: memref<7x256xf32, #tpu.memory_space<vmem>>, %arg6: memref<16x128xf32, #tpu.memory_space<vmem>>) attributes {dimension_semantics = [#tpu.dimension_semantics<parallel>], iteration_bounds = array<i64: 1>, scalar_prefetch = 0 : i64, scratch_operands = 0 : i64, tpu.core_type = #tpu.core_type<tc>, window_params = [{transform_indices = @transform_0, window_bounds = array<i64: 16, 128>}, {pipeline_mode = #tpu.pipeline_mode<synchronous>, transform_indices = @transform_1, window_bounds = array<i64: 128, 256>}, {pipeline_mode = #tpu.pipeline_mode<synchronous>, transform_indices = @transform_2, window_bounds = array<i64: 256, 256>}, {pipeline_mode = #tpu.pipeline_mode<synchronous>, transform_indices = @transform_3, window_bounds = array<i64: 256, 128>}, {pipeline_mode = #tpu.pipeline_mode<synchronous>, transform_indices = @transform_4, window_bounds = array<i64: 7, 256>}, {transform_indices = @transform_5, window_bounds = array<i64: 16, 128>}]} {
    %c0 = arith.constant 0 : index
    %c0_0 = arith.constant 0 : index
    %0 = vector.load %arg1[%c0, %c0_0] : memref<16x128xbf16, #tpu.memory_space<vmem>>, vector<16x128xbf16>
    %c0_1 = arith.constant 0 : index
    %c0_2 = arith.constant 0 : index
    %1 = vector.load %arg5[%c0_1, %c0_2] : memref<7x256xf32, #tpu.memory_space<vmem>>, vector<1x256xf32>
    %c1 = arith.constant 1 : index
    %c0_3 = arith.constant 0 : index
    %2 = vector.load %arg5[%c1, %c0_3] : memref<7x256xf32, #tpu.memory_space<vmem>>, vector<1x256xf32>
    %c2 = arith.constant 2 : index
    %c0_4 = arith.constant 0 : index
    %3 = vector.load %arg5[%c2, %c0_4] : memref<7x256xf32, #tpu.memory_space<vmem>>, vector<1x256xf32>
    %c0_5 = arith.constant 0 : index
    %c0_6 = arith.constant 0 : index
    %4 = vector.load %arg2[%c0_5, %c0_6] : memref<128x256xbf16, #tpu.memory_space<vmem>>, vector<128x256xbf16>
    %cst = arith.constant dense<0.000000e+00> : vector<16x256xf32>
    %5 = tpu.matmul %0, %4, %cst {dimension_numbers = #tpu.dot_dimension_numbers<[1], [0], [0], [1], [0, 0, 1, 1], [], []>} : vector<16x128xbf16>, vector<128x256xbf16>, vector<16x256xf32> -> vector<16x256xf32>
    %6 = vector.broadcast %1 : vector<1x256xf32> to vector<16x256xf32>
    %7 = arith.addf %5, %6 : vector<16x256xf32>
    %cst_7 = arith.constant dense<0.000000e+00> : vector<16xf32>
    %8 = vector.multi_reduction <add>, %7, %cst_7 [1] : vector<16x256xf32> to vector<16xf32>
    %9 = vector.shape_cast %8 : vector<16xf32> to vector<16x1xf32>
    %cst_8 = arith.constant 0.00520833349 : f32
    %10 = vector.broadcast %cst_8 : f32 to vector<16x1xf32>
    %11 = arith.mulf %9, %10 : vector<16x1xf32>
    %12 = vector.broadcast %11 : vector<16x1xf32> to vector<16x256xf32>
    %13 = arith.subf %7, %12 : vector<16x256xf32>
    %14 = arith.mulf %13, %13 : vector<16x256xf32>
    %cst_9 = arith.constant dense<0.000000e+00> : vector<16xf32>
    %15 = vector.multi_reduction <add>, %14, %cst_9 [1] : vector<16x256xf32> to vector<16xf32>
    %16 = vector.shape_cast %15 : vector<16xf32> to vector<16x1xf32>
    %cst_10 = arith.constant 6.400000e+01 : f32
    %17 = vector.broadcast %cst_10 : f32 to vector<16x1xf32>
    %18 = arith.mulf %17, %11 : vector<16x1xf32>
    %19 = arith.mulf %18, %11 : vector<16x1xf32>
    %20 = arith.subf %16, %19 : vector<16x1xf32>
    %cst_11 = arith.constant 0.00520833349 : f32
    %21 = vector.broadcast %cst_11 : f32 to vector<16x1xf32>
    %22 = arith.mulf %20, %21 : vector<16x1xf32>
    %cst_12 = arith.constant 9.99999974E-6 : f32
    %23 = vector.broadcast %cst_12 : f32 to vector<16x1xf32>
    %24 = arith.addf %22, %23 : vector<16x1xf32>
    %25 = math.rsqrt %24 : vector<16x1xf32>
    %26 = vector.broadcast %25 : vector<16x1xf32> to vector<16x256xf32>
    %27 = arith.mulf %13, %26 : vector<16x256xf32>
    %28 = vector.broadcast %2 : vector<1x256xf32> to vector<16x256xf32>
    %29 = arith.mulf %27, %28 : vector<16x256xf32>
    %30 = vector.broadcast %3 : vector<1x256xf32> to vector<16x256xf32>
    %31 = arith.addf %29, %30 : vector<16x256xf32>
    %cst_13 = arith.constant 0.000000e+00 : f32
    %32 = vector.broadcast %cst_13 : f32 to vector<16x256xf32>
    %33 = arith.maximumf %31, %32 : vector<16x256xf32>
    %34 = arith.truncf %33 : vector<16x256xf32> to vector<16x256xbf16>
    %c3 = arith.constant 3 : index
    %c0_14 = arith.constant 0 : index
    %35 = vector.load %arg5[%c3, %c0_14] : memref<7x256xf32, #tpu.memory_space<vmem>>, vector<1x256xf32>
    %c4 = arith.constant 4 : index
    %c0_15 = arith.constant 0 : index
    %36 = vector.load %arg5[%c4, %c0_15] : memref<7x256xf32, #tpu.memory_space<vmem>>, vector<1x256xf32>
    %c5 = arith.constant 5 : index
    %c0_16 = arith.constant 0 : index
    %37 = vector.load %arg5[%c5, %c0_16] : memref<7x256xf32, #tpu.memory_space<vmem>>, vector<1x256xf32>
    %c0_17 = arith.constant 0 : index
    %c0_18 = arith.constant 0 : index
    %38 = vector.load %arg3[%c0_17, %c0_18] : memref<256x256xbf16, #tpu.memory_space<vmem>>, vector<256x256xbf16>
    %cst_19 = arith.constant dense<0.000000e+00> : vector<16x256xf32>
    %39 = tpu.matmul %34, %38, %cst_19 {dimension_numbers = #tpu.dot_dimension_numbers<[1], [0], [0], [1], [0, 0, 1, 1], [], []>} : vector<16x256xbf16>, vector<256x256xbf16>, vector<16x256xf32> -> vector<16x256xf32>
    %40 = vector.broadcast %35 : vector<1x256xf32> to vector<16x256xf32>
    %41 = arith.addf %39, %40 : vector<16x256xf32>
    %cst_20 = arith.constant dense<0.000000e+00> : vector<16xf32>
    %42 = vector.multi_reduction <add>, %41, %cst_20 [1] : vector<16x256xf32> to vector<16xf32>
    %43 = vector.shape_cast %42 : vector<16xf32> to vector<16x1xf32>
    %cst_21 = arith.constant 0.00520833349 : f32
    %44 = vector.broadcast %cst_21 : f32 to vector<16x1xf32>
    %45 = arith.mulf %43, %44 : vector<16x1xf32>
    %46 = vector.broadcast %45 : vector<16x1xf32> to vector<16x256xf32>
    %47 = arith.subf %41, %46 : vector<16x256xf32>
    %48 = arith.mulf %47, %47 : vector<16x256xf32>
    %cst_22 = arith.constant dense<0.000000e+00> : vector<16xf32>
    %49 = vector.multi_reduction <add>, %48, %cst_22 [1] : vector<16x256xf32> to vector<16xf32>
    %50 = vector.shape_cast %49 : vector<16xf32> to vector<16x1xf32>
    %cst_23 = arith.constant 6.400000e+01 : f32
    %51 = vector.broadcast %cst_23 : f32 to vector<16x1xf32>
    %52 = arith.mulf %51, %45 : vector<16x1xf32>
    %53 = arith.mulf %52, %45 : vector<16x1xf32>
    %54 = arith.subf %50, %53 : vector<16x1xf32>
    %cst_24 = arith.constant 0.00520833349 : f32
    %55 = vector.broadcast %cst_24 : f32 to vector<16x1xf32>
    %56 = arith.mulf %54, %55 : vector<16x1xf32>
    %cst_25 = arith.constant 9.99999974E-6 : f32
    %57 = vector.broadcast %cst_25 : f32 to vector<16x1xf32>
    %58 = arith.addf %56, %57 : vector<16x1xf32>
    %59 = math.rsqrt %58 : vector<16x1xf32>
    %60 = vector.broadcast %59 : vector<16x1xf32> to vector<16x256xf32>
    %61 = arith.mulf %47, %60 : vector<16x256xf32>
    %62 = vector.broadcast %36 : vector<1x256xf32> to vector<16x256xf32>
    %63 = arith.mulf %61, %62 : vector<16x256xf32>
    %64 = vector.broadcast %37 : vector<1x256xf32> to vector<16x256xf32>
    %65 = arith.addf %63, %64 : vector<16x256xf32>
    %cst_26 = arith.constant 0.000000e+00 : f32
    %66 = vector.broadcast %cst_26 : f32 to vector<16x256xf32>
    %67 = arith.maximumf %65, %66 : vector<16x256xf32>
    %68 = arith.truncf %67 : vector<16x256xf32> to vector<16x256xbf16>
    %c6 = arith.constant 6 : index
    %c0_27 = arith.constant 0 : index
    %69 = vector.load %arg5[%c6, %c0_27] : memref<7x256xf32, #tpu.memory_space<vmem>>, vector<1x128xf32>
    %c0_28 = arith.constant 0 : index
    %c0_29 = arith.constant 0 : index
    %70 = vector.load %arg4[%c0_28, %c0_29] : memref<256x128xbf16, #tpu.memory_space<vmem>>, vector<256x128xbf16>
    %cst_30 = arith.constant dense<0.000000e+00> : vector<16x128xf32>
    %71 = tpu.matmul %68, %70, %cst_30 {dimension_numbers = #tpu.dot_dimension_numbers<[1], [0], [0], [1], [0, 0, 1, 1], [], []>} : vector<16x256xbf16>, vector<256x128xbf16>, vector<16x128xf32> -> vector<16x128xf32>
    %72 = vector.broadcast %69 : vector<1x128xf32> to vector<16x128xf32>
    %73 = arith.addf %71, %72 : vector<16x128xf32>
    %74 = math.tanh %73 : vector<16x128xf32>
    %c0_31 = arith.constant 0 : index
    %c0_32 = arith.constant 0 : index
    %75 = vector.load %arg6[%c0_31, %c0_32] : memref<16x128xf32, #tpu.memory_space<vmem>>, vector<16x128xf32>
    tpu.vector_store %arg6[%c0_31, %c0_32], %74 {strides = array<i32>} : memref<16x128xf32, #tpu.memory_space<vmem>>, vector<16x128xf32>,
    return
  }
  func.func @transform_0(%arg0: i32) -> (i32, i32) {
    %c0_i32 = arith.constant 0 : i32
    %c0_i32_0 = arith.constant 0 : i32
    return %arg0, %c0_i32 : i32, i32
  }
  func.func @transform_1(%arg0: i32) -> (i32, i32) {
    %c0_i32 = arith.constant 0 : i32
    %c0_i32_0 = arith.constant 0 : i32
    %c0_i32_1 = arith.constant 0 : i32
    return %c0_i32, %c0_i32_0 : i32, i32
  }
  func.func @transform_2(%arg0: i32) -> (i32, i32) {
    %c0_i32 = arith.constant 0 : i32
    %c0_i32_0 = arith.constant 0 : i32
    %c0_i32_1 = arith.constant 0 : i32
    return %c0_i32, %c0_i32_0 : i32, i32
  }
  func.func @transform_3(%arg0: i32) -> (i32, i32) {
    %c0_i32 = arith.constant 0 : i32
    %c0_i32_0 = arith.constant 0 : i32
    %c0_i32_1 = arith.constant 0 : i32
    return %c0_i32, %c0_i32_0 : i32, i32
  }
  func.func @transform_4(%arg0: i32) -> (i32, i32) {
    %c0_i32 = arith.constant 0 : i32
    %c0_i32_0 = arith.constant 0 : i32
    %c0_i32_1 = arith.constant 0 : i32
    return %c0_i32, %c0_i32_0 : i32, i32
  }
  func.func @transform_5(%arg0: i32) -> (i32, i32) {
    %c0_i32 = arith.constant 0 : i32
    %c0_i32_0 = arith.constant 0 : i32
    return %arg0, %c0_i32 : i32, i32
  }
}

</mosaic_0001>

<llo_original>
// kernel: tpu_custom_call.1
$region0: #{tpu_custom_call.1}
  #allocation0 [shape = 'u32[]', space=smem, size = 0x4, offset = 0x4, fixed_abs, tag = 'smem constant byte address 0x4 - core index']
  #allocation1 [shape = 'u32[72,128]{1,0:T(1,128)}', space=vmem, size = 0x9000, scoped, tag = 'internal scratch']
  %s0 = inlined_call_operand.hbm [shape: bf16[16,128], index: 0, kind: input, shape index: {}]
  %s1 = inlined_call_operand.hbm [shape: bf16[128,256], index: 1, kind: input, shape index: {}]
  %s2 = inlined_call_operand.hbm [shape: bf16[256,256], index: 2, kind: input, shape index: {}]
  %s3 = inlined_call_operand.hbm [shape: bf16[256,128], index: 3, kind: input, shape index: {}]
  %s4 = inlined_call_operand.hbm [shape: f32[7,256], index: 4, kind: input, shape index: {}]
  %s5 = inlined_call_operand.hbm [shape: f32[16,128], index: 5, kind: output, shape index: {}]
  %s6 = sld [smem:[#allocation0]]
  $region50: #{tpu_custom_call.1} parent=0
    _
  %s8 = ssub.s32 1, %s6
  %s9 = scalar_select 0, %s8, %s6
  $region1: #{tpu_custom_call.1} parent=0
    #allocation2 [shape = 'u8[4096]{0}', space=vmem, size = 0x1000, scoped, tag = 'input window, operand 0, single buffered']
    #allocation3 [shape = 's32[1]{0}', space=sflag, size = 0x4, scoped, tag = 'scoped memory for tpu_custom_call.1']
    #allocation4 [shape = 's32[1]{0}', space=sflag, size = 0x4, scoped, tag = 'scoped memory for tpu_custom_call.1']
    #allocation5 [shape = 'u8[65536]{0}', space=vmem, size = 0x10000, scoped, tag = 'input window, operand 1, single buffered']
    #allocation6 [shape = 's32[1]{0}', space=sflag, size = 0x4, scoped, tag = 'scoped memory for tpu_custom_call.1']
    #allocation7 [shape = 'u8[131072]{0}', space=vmem, size = 0x20000, scoped, tag = 'input window, operand 2, single buffered']
    #allocation8 [shape = 'u8[65536]{0}', space=vmem, size = 0x10000, scoped, tag = 'input window, operand 3, single buffered']
    #allocation9 [shape = 's32[1]{0}', space=sflag, size = 0x4, scoped, tag = 'scoped memory for tpu_custom_call.1']
    #allocation10 [shape = 'u8[8192]{0}', space=vmem, size = 0x2000, scoped, tag = 'input window, operand 4, single buffered']
    #allocation11 [shape = 'u8[8192]{0}', space=vmem, size = 0x2000, scoped, tag = 'output window, operand 0, single buffered']
    %10 = vsyncpa [#allocation3], 0
    %11 = vsyncpa [#allocation6], 0
    %12 = vsyncpa [#allocation9], 0
    %13 = vsyncpa [#allocation4], 0
    // Predicated region
    $region2: #{tpu_custom_call.1} parent=1 // pred_check
      _
    $region3: #{tpu_custom_call.1} parent=1 // pred_check_branch
      %15 = sbr.rel (0) target = $region5
    $region4: #{tpu_custom_call.1} parent=1 // pred_region
      %17 = vsyncadd [#allocation3], 0
      %s18 = sshll.u32 %s0, 4
      %s19 = int_to_ptr.hbm [resolvable:$true] %s18
      %s20 = sshll.u32 [#allocation2], 4
      %s21 = int_to_ptr.vmem [resolvable:$true] %s20
      %26 = dma.hbm_to_vmem [thread:$0]  %s19, 128, %s21, [#allocation3], 64, 64, 4
    $region5: #{tpu_custom_call.1} parent=1 // pred_fallthru
      _
    // Predicated region
    $region6: #{tpu_custom_call.1} parent=1 // pred_check
      _
    $region7: #{tpu_custom_call.1} parent=1 // pred_check_branch
      %28 = sbr.rel (0) target = $region9
    $region8: #{tpu_custom_call.1} parent=1 // pred_region
      %30 = vsyncadd [#allocation6], 0
      %s31 = sshll.u32 %s1, 4
      %s32 = int_to_ptr.hbm [resolvable:$true] %s31
      %s33 = sshll.u32 [#allocation5], 4
      %s34 = int_to_ptr.vmem [resolvable:$true] %s33
      %39 = dma.hbm_to_vmem [thread:$0]  %s32, 2048, %s34, [#allocation6], 128, 128, 8
    $region9: #{tpu_custom_call.1} parent=1 // pred_fallthru
      _
    // Predicated region
    $region10: #{tpu_custom_call.1} parent=1 // pred_check
      _
    $region11: #{tpu_custom_call.1} parent=1 // pred_check_branch
      %41 = sbr.rel (0) target = $region13
    $region12: #{tpu_custom_call.1} parent=1 // pred_region
      %43 = vsyncadd [#allocation6], 0
      %s44 = sshll.u32 %s2, 4
      %s45 = int_to_ptr.hbm [resolvable:$true] %s44
      %s46 = sshll.u32 [#allocation7], 4
      %s47 = int_to_ptr.vmem [resolvable:$true] %s46
      %52 = dma.hbm_to_vmem [thread:$0]  %s45, 4096, %s47, [#allocation6], 128, 128, 8
    $region13: #{tpu_custom_call.1} parent=1 // pred_fallthru
      _
    // Predicated region
    $region14: #{tpu_custom_call.1} parent=1 // pred_check
      _
    $region15: #{tpu_custom_call.1} parent=1 // pred_check_branch
      %54 = sbr.rel (0) target = $region17
    $region16: #{tpu_custom_call.1} parent=1 // pred_region
      %56 = vsyncadd [#allocation9], 0
      %s57 = sshll.u32 %s3, 4
      %s58 = int_to_ptr.hbm [resolvable:$true] %s57
      %s59 = sshll.u32 [#allocation8], 4
      %s60 = int_to_ptr.vmem [resolvable:$true] %s59
      %65 = dma.hbm_to_vmem [thread:$0]  %s58, 2048, %s60, [#allocation9], 64, 64, 4
    $region17: #{tpu_custom_call.1} parent=1 // pred_fallthru
      _
    // Predicated region
    $region18: #{tpu_custom_call.1} parent=1 // pred_check
      _
    $region19: #{tpu_custom_call.1} parent=1 // pred_check_branch
      %67 = sbr.rel (0) target = $region21
    $region20: #{tpu_custom_call.1} parent=1 // pred_region
      %69 = vsyncadd [#allocation9], 0
      %s71 = sshll.u32 %s4, 4
      %s72 = int_to_ptr.hbm [resolvable:$true] %s71
      %s73 = sshll.u32 [#allocation10], 4
      %s74 = int_to_ptr.vmem [resolvable:$true] %s73
      %76 = dma.hbm_to_vmem [thread:$0]  %s72, 256, %s74, [#allocation9]
    $region21: #{tpu_custom_call.1} parent=1 // pred_fallthru
      _
    // Predicated region
    $region22: #{tpu_custom_call.1} parent=1 // pred_check
      _
    $region23: #{tpu_custom_call.1} parent=1 // pred_check_branch
      %78 = sbr.rel (0) target = $region25
    $region24: #{tpu_custom_call.1} parent=1 // pred_region
      %80 = dma.done [#allocation3], 128
    $region25: #{tpu_custom_call.1} parent=1 // pred_fallthru
      _
    // Predicated region
    $region26: #{tpu_custom_call.1} parent=1 // pred_check
      _
    $region27: #{tpu_custom_call.1} parent=1 // pred_check_branch
      %82 = sbr.rel (0) target = $region29
    $region28: #{tpu_custom_call.1} parent=1 // pred_region
      %84 = dma.done [#allocation6], 2048
    $region29: #{tpu_custom_call.1} parent=1 // pred_fallthru
      _
    // Predicated region
    $region30: #{tpu_custom_call.1} parent=1 // pred_check
      _
    $region31: #{tpu_custom_call.1} parent=1 // pred_check_branch
      %86 = sbr.rel (0) target = $region33
    $region32: #{tpu_custom_call.1} parent=1 // pred_region
      %88 = dma.done [#allocation6], 4096
    $region33: #{tpu_custom_call.1} parent=1 // pred_fallthru
      _
    // Predicated region
    $region34: #{tpu_custom_call.1} parent=1 // pred_check
      _
    $region35: #{tpu_custom_call.1} parent=1 // pred_check_branch
      %90 = sbr.rel (0) target = $region37
    $region36: #{tpu_custom_call.1} parent=1 // pred_region
      %92 = dma.done [#allocation9], 2048
    $region37: #{tpu_custom_call.1} parent=1 // pred_fallthru
      _
    // Predicated region
    $region38: #{tpu_custom_call.1} parent=1 // pred_check
      _
    $region39: #{tpu_custom_call.1} parent=1 // pred_check_branch
      %94 = sbr.rel (0) target = $region41
    $region40: #{tpu_custom_call.1} parent=1 // pred_region
      %96 = dma.done [#allocation9], 256
    $region41: #{tpu_custom_call.1} parent=1 // pred_fallthru
      _
    %v97 = vld [vmem:[#allocation2] sm:$0xf]
    %v98 = vld [vmem:[#allocation2 + $0x4] sm:$0xf]
    %v99 = vld [vmem:[#allocation10] ss:$8 sm:$0x3]
    %s100 = scalar_lea.vmem [#allocation10], 1
    %v101 = vld [vmem:[%s100] ss:$8 sm:$0x3]
    %s102 = scalar_lea.vmem [#allocation10], 2
    %v103 = vld [vmem:[%s102] ss:$8 sm:$0x3]
    %v104 = vld [vmem:[#allocation5] sm:$0xff]
    %v105 = vld [vmem:[#allocation5 + $0x8] sm:$0xff]
    %v106 = vld [vmem:[#allocation5 + $0x10] sm:$0xff]
    %v107 = vld [vmem:[#allocation5 + $0x18] sm:$0xff]
    %v108 = vld [vmem:[#allocation5 + $0x20] sm:$0xff]
    %v109 = vld [vmem:[#allocation5 + $0x28] sm:$0xff]
    %v110 = vld [vmem:[#allocation5 + $0x30] sm:$0xff]
    %v111 = vld [vmem:[#allocation5 + $0x38] sm:$0xff]
    %v112 = vld [vmem:[#allocation5 + $0x40] sm:$0xff]
    %v113 = vld [vmem:[#allocation5 + $0x48] sm:$0xff]
    %v114 = vld [vmem:[#allocation5 + $0x50] sm:$0xff]
    %v115 = vld [vmem:[#allocation5 + $0x58] sm:$0xff]
    %v116 = vld [vmem:[#allocation5 + $0x60] sm:$0xff]
    %v117 = vld [vmem:[#allocation5 + $0x68] sm:$0xff]
    %v118 = vld [vmem:[#allocation5 + $0x70] sm:$0xff]
    %v119 = vld [vmem:[#allocation5 + $0x78] sm:$0xff]
    %v121 = vperm.slane %v99, 0
    %v122 = vperm.slane %v99, 1
    %v127 = vunpack.c.l.b16 %v97
    %v128 = vunpack.c.l.b16 %v98
    %v129 = vpack.c.b16 %v128, %v127
    %v147 = vunpack.c.l.b16 %v104
    %v148 = vunpack.c.h.b16 %v104
    %v149 = vunpack.c.l.b16 %v105
    %v150 = vunpack.c.h.b16 %v105
    %v151 = vunpack.c.l.b16 %v106
    %v152 = vunpack.c.h.b16 %v106
    %v153 = vunpack.c.l.b16 %v107
    %v154 = vunpack.c.h.b16 %v107
    %v155 = vunpack.c.l.b16 %v108
    %v156 = vunpack.c.h.b16 %v108
    %v157 = vunpack.c.l.b16 %v109
    %v158 = vunpack.c.h.b16 %v109
    %v159 = vunpack.c.l.b16 %v110
    %v160 = vunpack.c.h.b16 %v110
    %v161 = vunpack.c.l.b16 %v111
    %v162 = vunpack.c.h.b16 %v111
    %v163 = vunpack.c.l.b16 %v112
    %v164 = vunpack.c.h.b16 %v112
    %v165 = vunpack.c.l.b16 %v113
    %v166 = vunpack.c.h.b16 %v113
    %v167 = vunpack.c.l.b16 %v114
    %v168 = vunpack.c.h.b16 %v114
    %v169 = vunpack.c.l.b16 %v115
    %v170 = vunpack.c.h.b16 %v115
    %v171 = vunpack.c.l.b16 %v116
    %v172 = vunpack.c.h.b16 %v116
    %v173 = vunpack.c.l.b16 %v117
    %v174 = vunpack.c.h.b16 %v117
    %v175 = vunpack.c.l.b16 %v118
    %v176 = vunpack.c.h.b16 %v118
    %v177 = vunpack.c.l.b16 %v119
    %v178 = vunpack.c.h.b16 %v119
    %v179 = vpack.c.b16 %v149, %v147
    %v180 = vpack.c.b16 %v150, %v148
    %v181 = vpack.c.b16 %v153, %v151
    %v182 = vpack.c.b16 %v154, %v152
    %v183 = vpack.c.b16 %v157, %v155
    %v184 = vpack.c.b16 %v158, %v156
    %v185 = vpack.c.b16 %v161, %v159
    %v186 = vpack.c.b16 %v162, %v160
    %v187 = vpack.c.b16 %v165, %v163
    %v188 = vpack.c.b16 %v166, %v164
    %v189 = vpack.c.b16 %v169, %v167
    %v190 = vpack.c.b16 %v170, %v168
    %v191 = vpack.c.b16 %v173, %v171
    %v192 = vpack.c.b16 %v174, %v172
    %v193 = vpack.c.b16 %v177, %v175
    %v194 = vpack.c.b16 %v178, %v176
    %211 = vmatpush.bf16.msra.mxu0 %v193
    %212 = vmatpush.bf16.msra.mxu0 %v191
    %213 = vmatpush.bf16.msra.mxu0 %v189
    %214 = vmatpush.bf16.msra.mxu0 %v187
    %215 = vmatpush.bf16.msra.mxu0 %v185
    %216 = vmatpush.bf16.msra.mxu0 %v183
    %217 = vmatpush.bf16.msra.mxu0 %v181
    %218 = vmatpush.bf16.msra.mxu0 %v179
    %219 = vmatmul.bf16.gmra.mxu0 %v129
    %v220 = vpop.f32.mrf.mxu0
    %v221 = vadd.f32 %v121, %v220
    %v222 = vpop.f32.mrf.mxu0
    %v223 = vadd.f32 %v121, %v222
    %224 = vdwg.mxu0
    %225 = vmatpush.bf16.msra.mxu0 %v194
    %226 = vmatpush.bf16.msra.mxu0 %v192
    %227 = vmatpush.bf16.msra.mxu0 %v190
    %228 = vmatpush.bf16.msra.mxu0 %v188
    %229 = vmatpush.bf16.msra.mxu0 %v186
    %230 = vmatpush.bf16.msra.mxu0 %v184
    %231 = vmatpush.bf16.msra.mxu0 %v182
    %232 = vmatpush.bf16.msra.mxu0 %v180
    %233 = vmatmul.bf16.gmra.mxu0 %v129
    %v234 = vpop.f32.mrf.mxu0
    %v235 = vadd.f32 %v122, %v234
    %v236 = vpop.f32.mrf.mxu0
    %v237 = vadd.f32 %v122, %v236
    %238 = vdwg.mxu0
    %v239 = vadd.f32 %v221, %v235
    %240 = vadd.xlane.f32.xlu0 %v239
    %v241 = vpop.xlane.xlu0 %240
    %v242 = vadd.f32 %v223, %v237
    %243 = vadd.xlane.f32.xlu0 %v242
    %v244 = vpop.xlane.xlu0 %243
    %v245 = vmul.f32 %v241, 0.0052083335
    %v246 = vmul.f32 %v244, 0.0052083335
    %v247 = vsub.f32 %v221, %v245
    %v248 = vsub.f32 %v235, %v245
    %v249 = vsub.f32 %v223, %v246
    %v250 = vsub.f32 %v237, %v246
    %v251 = vmul.f32 %v247, %v247
    %v252 = vmul.f32 %v248, %v248
    %v253 = vmul.f32 %v249, %v249
    %v254 = vmul.f32 %v250, %v250
    %v255 = vadd.f32 %v251, %v252
    %256 = vadd.xlane.f32.xlu0 %v255
    %v257 = vpop.xlane.xlu0 %256
    %v258 = vadd.f32 %v253, %v254
    %259 = vadd.xlane.f32.xlu0 %v258
    %v260 = vpop.xlane.xlu0 %259
    %v261 = vmul.f32 %v245, 64.0
    %v262 = vmul.f32 %v246, 64.0
    %v263 = vmul.f32 %v261, %v245
    %v264 = vmul.f32 %v262, %v246
    %v265 = vsub.f32 %v257, %v263
    %v266 = vsub.f32 %v260, %v264
    %v267 = vmul.f32 %v265, 0.0052083335
    %v268 = vmul.f32 %v266, 0.0052083335
    %v269 = vadd.f32 %v267, 1e-05
    %v270 = vadd.f32 %v268, 1e-05
    %v271 = vrsqrt.pop %v269
    %v272 = vmul.f32 %v271, %v269
    %v273 = vmul.f32 %v272, %v271
    %v274 = vmul.f32 0.5, %v273
    %v275 = vsub.f32 1.5, %v274
    %v276 = vmul.f32 %v271, %v275
    %vm277 = vweird.f32 %v269
    %vm278 = vweird.f32 %v271
    %vm279 = vmor %vm277, %vm278
    %v280 = vsel %vm279, %v271, %v276
    %v281 = vrsqrt.pop %v270
    %v282 = vmul.f32 %v281, %v270
    %v283 = vmul.f32 %v282, %v281
    %v284 = vmul.f32 0.5, %v283
    %v285 = vsub.f32 1.5, %v284
    %v286 = vmul.f32 %v281, %v285
    %vm287 = vweird.f32 %v270
    %vm288 = vweird.f32 %v281
    %vm289 = vmor %vm287, %vm288
    %v290 = vsel %vm289, %v281, %v286
    %v291 = vmul.f32 %v247, %v280
    %v292 = vmul.f32 %v248, %v280
    %v293 = vmul.f32 %v249, %v290
    %v294 = vmul.f32 %v250, %v290
    %v296 = vperm.slane %v101, 0
    %v297 = vperm.slane %v101, 1
    %v300 = vmul.f32 %v291, %v296
    %v301 = vmul.f32 %v292, %v297
    %v302 = vmul.f32 %v293, %v296
    %v303 = vmul.f32 %v294, %v297
    %v305 = vperm.slane %v103, 0
    %v306 = vperm.slane %v103, 1
    %v309 = vadd.f32 %v300, %v305
    %v310 = vadd.f32 %v301, %v306
    %v311 = vadd.f32 %v302, %v305
    %v312 = vadd.f32 %v303, %v306
    %v313 = vmax.f32 %v309, 0.0
    %v314 = vmax.f32 %v310, 0.0
    %v315 = vmax.f32 %v311, 0.0
    %v316 = vmax.f32 %v312, 0.0
    %v317 = vpack.c.bf16 %v315, %v313
    %v318 = vpack.c.bf16 %v316, %v314
    %s319 = scalar_lea.vmem [#allocation10], 3
    %v320 = vld [vmem:[%s319] ss:$8 sm:$0x3]
    %s321 = scalar_lea.vmem [#allocation10], 4
    %v322 = vld [vmem:[%s321] ss:$8 sm:$0x3]
    %s323 = scalar_lea.vmem [#allocation10], 5
    %v324 = vld [vmem:[%s323] ss:$8 sm:$0x3]
    %v325 = vld [vmem:[#allocation7] sm:$0xff]
    %v326 = vld [vmem:[#allocation7 + $0x8] sm:$0xff]
    %v327 = vld [vmem:[#allocation7 + $0x10] sm:$0xff]
    %v328 = vld [vmem:[#allocation7 + $0x18] sm:$0xff]
    %v329 = vld [vmem:[#allocation7 + $0x20] sm:$0xff]
    %v330 = vld [vmem:[#allocation7 + $0x28] sm:$0xff]
    %v331 = vld [vmem:[#allocation7 + $0x30] sm:$0xff]
    %v332 = vld [vmem:[#allocation7 + $0x38] sm:$0xff]
    %v333 = vld [vmem:[#allocation7 + $0x40] sm:$0xff]
    %v334 = vld [vmem:[#allocation7 + $0x48] sm:$0xff]
    %v335 = vld [vmem:[#allocation7 + $0x50] sm:$0xff]
    %v336 = vld [vmem:[#allocation7 + $0x58] sm:$0xff]
    %v337 = vld [vmem:[#allocation7 + $0x60] sm:$0xff]
    %v338 = vld [vmem:[#allocation7 + $0x68] sm:$0xff]
    %v339 = vld [vmem:[#allocation7 + $0x70] sm:$0xff]
    %v340 = vld [vmem:[#allocation7 + $0x78] sm:$0xff]
    %v341 = vld [vmem:[#allocation7 + $0x80] sm:$0xff]
    %v342 = vld [vmem:[#allocation7 + $0x88] sm:$0xff]
    %v343 = vld [vmem:[#allocation7 + $0x90] sm:$0xff]
    %v344 = vld [vmem:[#allocation7 + $0x98] sm:$0xff]
    %v345 = vld [vmem:[#allocation7 + $0xa0] sm:$0xff]
    %v346 = vld [vmem:[#allocation7 + $0xa8] sm:$0xff]
    %v347 = vld [vmem:[#allocation7 + $0xb0] sm:$0xff]
    %v348 = vld [vmem:[#allocation7 + $0xb8] sm:$0xff]
    %v349 = vld [vmem:[#allocation7 + $0xc0] sm:$0xff]
    %v350 = vld [vmem:[#allocation7 + $0xc8] sm:$0xff]
    %v351 = vld [vmem:[#allocation7 + $0xd0] sm:$0xff]
    %v352 = vld [vmem:[#allocation7 + $0xd8] sm:$0xff]
    %v353 = vld [vmem:[#allocation7 + $0xe0] sm:$0xff]
    %v354 = vld [vmem:[#allocation7 + $0xe8] sm:$0xff]
    %v355 = vld [vmem:[#allocation7 + $0xf0] sm:$0xff]
    %v356 = vld [vmem:[#allocation7 + $0xf8] sm:$0xff]
    %v358 = vperm.slane %v320, 0
    %v359 = vperm.slane %v320, 1
    %v394 = vunpack.c.l.b16 %v325
    %v395 = vunpack.c.h.b16 %v325
    %v396 = vunpack.c.l.b16 %v326
    %v397 = vunpack.c.h.b16 %v326
    %v398 = vunpack.c.l.b16 %v327
    %v399 = vunpack.c.h.b16 %v327
    %v400 = vunpack.c.l.b16 %v328
    %v401 = vunpack.c.h.b16 %v328
    %v402 = vunpack.c.l.b16 %v329
    %v403 = vunpack.c.h.b16 %v329
    %v404 = vunpack.c.l.b16 %v330
    %v405 = vunpack.c.h.b16 %v330
    %v406 = vunpack.c.l.b16 %v331
    %v407 = vunpack.c.h.b16 %v331
    %v408 = vunpack.c.l.b16 %v332
    %v409 = vunpack.c.h.b16 %v332
    %v410 = vunpack.c.l.b16 %v333
    %v411 = vunpack.c.h.b16 %v333
    %v412 = vunpack.c.l.b16 %v334
    %v413 = vunpack.c.h.b16 %v334
    %v414 = vunpack.c.l.b16 %v335
    %v415 = vunpack.c.h.b16 %v335
    %v416 = vunpack.c.l.b16 %v336
    %v417 = vunpack.c.h.b16 %v336
    %v418 = vunpack.c.l.b16 %v337
    %v419 = vunpack.c.h.b16 %v337
    %v420 = vunpack.c.l.b16 %v338
    %v421 = vunpack.c.h.b16 %v338
    %v422 = vunpack.c.l.b16 %v339
    %v423 = vunpack.c.h.b16 %v339
    %v424 = vunpack.c.l.b16 %v340
    %v425 = vunpack.c.h.b16 %v340
    %v426 = vunpack.c.l.b16 %v341
    %v427 = vunpack.c.h.b16 %v341
    %v428 = vunpack.c.l.b16 %v342
    %v429 = vunpack.c.h.b16 %v342
    %v430 = vunpack.c.l.b16 %v343
    %v431 = vunpack.c.h.b16 %v343
    %v432 = vunpack.c.l.b16 %v344
    %v433 = vunpack.c.h.b16 %v344
    %v434 = vunpack.c.l.b16 %v345
    %v435 = vunpack.c.h.b16 %v345
    %v436 = vunpack.c.l.b16 %v346
    %v437 = vunpack.c.h.b16 %v346
    %v438 = vunpack.c.l.b16 %v347
    %v439 = vunpack.c.h.b16 %v347
    %v440 = vunpack.c.l.b16 %v348
    %v441 = vunpack.c.h.b16 %v348
    %v442 = vunpack.c.l.b16 %v349
    %v443 = vunpack.c.h.b16 %v349
    %v444 = vunpack.c.l.b16 %v350
    %v445 = vunpack.c.h.b16 %v350
    %v446 = vunpack.c.l.b16 %v351
    %v447 = vunpack.c.h.b16 %v351
    %v448 = vunpack.c.l.b16 %v352
    %v449 = vunpack.c.h.b16 %v352
    %v450 = vunpack.c.l.b16 %v353
    %v451 = vunpack.c.h.b16 %v353
    %v452 = vunpack.c.l.b16 %v354
    %v453 = vunpack.c.h.b16 %v354
    %v454 = vunpack.c.l.b16 %v355
    %v455 = vunpack.c.h.b16 %v355
    %v456 = vunpack.c.l.b16 %v356
    %v457 = vunpack.c.h.b16 %v356
    %v458 = vpack.c.b16 %v396, %v394
    %v459 = vpack.c.b16 %v397, %v395
    %v460 = vpack.c.b16 %v400, %v398
    %v461 = vpack.c.b16 %v401, %v399
    %v462 = vpack.c.b16 %v404, %v402
    %v463 = vpack.c.b16 %v405, %v403
    %v464 = vpack.c.b16 %v408, %v406
    %v465 = vpack.c.b16 %v409, %v407
    %v466 = vpack.c.b16 %v412, %v410
    %v467 = vpack.c.b16 %v413, %v411
    %v468 = vpack.c.b16 %v416, %v414
    %v469 = vpack.c.b16 %v417, %v415
    %v470 = vpack.c.b16 %v420, %v418
    %v471 = vpack.c.b16 %v421, %v419
    %v472 = vpack.c.b16 %v424, %v422
    %v473 = vpack.c.b16 %v425, %v423
    %v474 = vpack.c.b16 %v428, %v426
    %v475 = vpack.c.b16 %v429, %v427
    %v476 = vpack.c.b16 %v432, %v430
    %v477 = vpack.c.b16 %v433, %v431
    %v478 = vpack.c.b16 %v436, %v434
    %v479 = vpack.c.b16 %v437, %v435
    %v480 = vpack.c.b16 %v440, %v438
    %v481 = vpack.c.b16 %v441, %v439
    %v482 = vpack.c.b16 %v444, %v442
    %v483 = vpack.c.b16 %v445, %v443
    %v484 = vpack.c.b16 %v448, %v446
    %v485 = vpack.c.b16 %v449, %v447
    %v486 = vpack.c.b16 %v452, %v450
    %v487 = vpack.c.b16 %v453, %v451
    %v488 = vpack.c.b16 %v456, %v454
    %v489 = vpack.c.b16 %v457, %v455
    %522 = vmatpush.bf16.msra.mxu0 %v472
    %523 = vmatpush.bf16.msra.mxu0 %v470
    %524 = vmatpush.bf16.msra.mxu0 %v468
    %525 = vmatpush.bf16.msra.mxu0 %v466
    %526 = vmatpush.bf16.msra.mxu0 %v464
    %527 = vmatpush.bf16.msra.mxu0 %v462
    %528 = vmatpush.bf16.msra.mxu0 %v460
    %529 = vmatpush.bf16.msra.mxu0 %v458
    %530 = vmatmul.bf16.gmra.mxu0 %v317
    %v531 = vpop.f32.mrf.mxu0
    %v532 = vadd.f32 %v358, %v531
    %v533 = vpop.f32.mrf.mxu0
    %v534 = vadd.f32 %v358, %v533
    %535 = vdwg.mxu0
    %536 = vmatpush.bf16.msra.mxu0 %v488
    %537 = vmatpush.bf16.msra.mxu0 %v486
    %538 = vmatpush.bf16.msra.mxu0 %v484
    %539 = vmatpush.bf16.msra.mxu0 %v482
    %540 = vmatpush.bf16.msra.mxu0 %v480
    %541 = vmatpush.bf16.msra.mxu0 %v478
    %542 = vmatpush.bf16.msra.mxu0 %v476
    %543 = vmatpush.bf16.msra.mxu0 %v474
    %544 = vmatmul.bf16.gmra.mxu0 %v318
    %v545 = vpop.f32.mrf.mxu0
    %v546 = vadd.f32 %v532, %v545
    %v547 = vpop.f32.mrf.mxu0
    %v548 = vadd.f32 %v534, %v547
    %549 = vdwg.mxu0
    %550 = vmatpush.bf16.msra.mxu0 %v473
    %551 = vmatpush.bf16.msra.mxu0 %v471
    %552 = vmatpush.bf16.msra.mxu0 %v469
    %553 = vmatpush.bf16.msra.mxu0 %v467
    %554 = vmatpush.bf16.msra.mxu0 %v465
    %555 = vmatpush.bf16.msra.mxu0 %v463
    %556 = vmatpush.bf16.msra.mxu0 %v461
    %557 = vmatpush.bf16.msra.mxu0 %v459
    %558 = vmatmul.bf16.gmra.mxu0 %v317
    %v559 = vpop.f32.mrf.mxu0
    %v560 = vadd.f32 %v359, %v559
    %v561 = vpop.f32.mrf.mxu0
    %v562 = vadd.f32 %v359, %v561
    %563 = vdwg.mxu0
    %564 = vmatpush.bf16.msra.mxu0 %v489
    %565 = vmatpush.bf16.msra.mxu0 %v487
    %566 = vmatpush.bf16.msra.mxu0 %v485
    %567 = vmatpush.bf16.msra.mxu0 %v483
    %568 = vmatpush.bf16.msra.mxu0 %v481
    %569 = vmatpush.bf16.msra.mxu0 %v479
    %570 = vmatpush.bf16.msra.mxu0 %v477
    %571 = vmatpush.bf16.msra.mxu0 %v475
    %572 = vmatmul.bf16.gmra.mxu0 %v318
    %v573 = vpop.f32.mrf.mxu0
    %v574 = vadd.f32 %v560, %v573
    %v575 = vpop.f32.mrf.mxu0
    %v576 = vadd.f32 %v562, %v575
    %577 = vdwg.mxu0
    %v578 = vadd.f32 %v546, %v574
    %579 = vadd.xlane.f32.xlu0 %v578
    %v580 = vpop.xlane.xlu0 %579
    %v581 = vadd.f32 %v548, %v576
    %582 = vadd.xlane.f32.xlu0 %v581
    %v583 = vpop.xlane.xlu0 %582
    %v584 = vmul.f32 %v580, 0.0052083335
    %v585 = vmul.f32 %v583, 0.0052083335
    %v586 = vsub.f32 %v546, %v584
    %v587 = vsub.f32 %v574, %v584
    %v588 = vsub.f32 %v548, %v585
    %v589 = vsub.f32 %v576, %v585
    %v590 = vmul.f32 %v586, %v586
    %v591 = vmul.f32 %v587, %v587
    %v592 = vmul.f32 %v588, %v588
    %v593 = vmul.f32 %v589, %v589
    %v594 = vadd.f32 %v590, %v591
    %595 = vadd.xlane.f32.xlu0 %v594
    %v596 = vpop.xlane.xlu0 %595
    %v597 = vadd.f32 %v592, %v593
    %598 = vadd.xlane.f32.xlu0 %v597
    %v599 = vpop.xlane.xlu0 %598
    %v600 = vmul.f32 %v584, 64.0
    %v601 = vmul.f32 %v585, 64.0
    %v602 = vmul.f32 %v600, %v584
    %v603 = vmul.f32 %v601, %v585
    %v604 = vsub.f32 %v596, %v602
    %v605 = vsub.f32 %v599, %v603
    %v606 = vmul.f32 %v604, 0.0052083335
    %v607 = vmul.f32 %v605, 0.0052083335
    %v608 = vadd.f32 %v606, 1e-05
    %v609 = vadd.f32 %v607, 1e-05
    %v610 = vrsqrt.pop %v608
    %v611 = vmul.f32 %v610, %v608
    %v612 = vmul.f32 %v611, %v610
    %v613 = vmul.f32 0.5, %v612
    %v614 = vsub.f32 1.5, %v613
    %v615 = vmul.f32 %v610, %v614
    %vm616 = vweird.f32 %v608
    %vm617 = vweird.f32 %v610
    %vm618 = vmor %vm616, %vm617
    %v619 = vsel %vm618, %v610, %v615
    %v620 = vrsqrt.pop %v609
    %v621 = vmul.f32 %v620, %v609
    %v622 = vmul.f32 %v621, %v620
    %v623 = vmul.f32 0.5, %v622
    %v624 = vsub.f32 1.5, %v623
    %v625 = vmul.f32 %v620, %v624
    %vm626 = vweird.f32 %v609
    %vm627 = vweird.f32 %v620
    %vm628 = vmor %vm626, %vm627
    %v629 = vsel %vm628, %v620, %v625
    %v630 = vmul.f32 %v586, %v619
    %v631 = vmul.f32 %v587, %v619
    %v632 = vmul.f32 %v588, %v629
    %v633 = vmul.f32 %v589, %v629
    %v635 = vperm.slane %v322, 0
    %v636 = vperm.slane %v322, 1
    %v639 = vmul.f32 %v630, %v635
    %v640 = vmul.f32 %v631, %v636
    %v641 = vmul.f32 %v632, %v635
    %v642 = vmul.f32 %v633, %v636
    %v644 = vperm.slane %v324, 0
    %v645 = vperm.slane %v324, 1
    %v648 = vadd.f32 %v639, %v644
    %v649 = vadd.f32 %v640, %v645
    %v650 = vadd.f32 %v641, %v644
    %v651 = vadd.f32 %v642, %v645
    %v652 = vmax.f32 %v648, 0.0
    %v653 = vmax.f32 %v649, 0.0
    %v654 = vmax.f32 %v650, 0.0
    %v655 = vmax.f32 %v651, 0.0
    %v656 = vpack.c.bf16 %v654, %v652
    %v657 = vpack.c.bf16 %v655, %v653
    %v658 = vld [vmem:[#allocation10 + $0x6] ss:$0 sm:$0xff]
    %v659 = vld [vmem:[#allocation8] sm:$0xf]
    %v660 = vld [vmem:[#allocation8 + $0x4] sm:$0xf]
    %v661 = vld [vmem:[#allocation8 + $0x8] sm:$0xf]
    %v662 = vld [vmem:[#allocation8 + $0xc] sm:$0xf]
    %v663 = vld [vmem:[#allocation8 + $0x10] sm:$0xf]
    %v664 = vld [vmem:[#allocation8 + $0x14] sm:$0xf]
    %v665 = vld [vmem:[#allocation8 + $0x18] sm:$0xf]
    %v666 = vld [vmem:[#allocation8 + $0x1c] sm:$0xf]
    %v667 = vld [vmem:[#allocation8 + $0x20] sm:$0xf]
    %v668 = vld [vmem:[#allocation8 + $0x24] sm:$0xf]
    %v669 = vld [vmem:[#allocation8 + $0x28] sm:$0xf]
    %v670 = vld [vmem:[#allocation8 + $0x2c] sm:$0xf]
    %v671 = vld [vmem:[#allocation8 + $0x30] sm:$0xf]
    %v672 = vld [vmem:[#allocation8 + $0x34] sm:$0xf]
    %v673 = vld [vmem:[#allocation8 + $0x38] sm:$0xf]
    %v674 = vld [vmem:[#allocation8 + $0x3c] sm:$0xf]
    %v675 = vld [vmem:[#allocation8 + $0x40] sm:$0xf]
    %v676 = vld [vmem:[#allocation8 + $0x44] sm:$0xf]
    %v677 = vld [vmem:[#allocation8 + $0x48] sm:$0xf]
    %v678 = vld [vmem:[#allocation8 + $0x4c] sm:$0xf]
    %v679 = vld [vmem:[#allocation8 + $0x50] sm:$0xf]
    %v680 = vld [vmem:[#allocation8 + $0x54] sm:$0xf]
    %v681 = vld [vmem:[#allocation8 + $0x58] sm:$0xf]
    %v682 = vld [vmem:[#allocation8 + $0x5c] sm:$0xf]
    %v683 = vld [vmem:[#allocation8 + $0x60] sm:$0xf]
    %v684 = vld [vmem:[#allocation8 + $0x64] sm:$0xf]
    %v685 = vld [vmem:[#allocation8 + $0x68] sm:$0xf]
    %v686 = vld [vmem:[#allocation8 + $0x6c] sm:$0xf]
    %v687 = vld [vmem:[#allocation8 + $0x70] sm:$0xf]
    %v688 = vld [vmem:[#allocation8 + $0x74] sm:$0xf]
    %v689 = vld [vmem:[#allocation8 + $0x78] sm:$0xf]
    %v690 = vld [vmem:[#allocation8 + $0x7c] sm:$0xf]
    %v723 = vunpack.c.l.b16 %v659
    %v724 = vunpack.c.l.b16 %v660
    %v725 = vunpack.c.l.b16 %v661
    %v726 = vunpack.c.l.b16 %v662
    %v727 = vunpack.c.l.b16 %v663
    %v728 = vunpack.c.l.b16 %v664
    %v729 = vunpack.c.l.b16 %v665
    %v730 = vunpack.c.l.b16 %v666
    %v731 = vunpack.c.l.b16 %v667
    %v732 = vunpack.c.l.b16 %v668
    %v733 = vunpack.c.l.b16 %v669
    %v734 = vunpack.c.l.b16 %v670
    %v735 = vunpack.c.l.b16 %v671
    %v736 = vunpack.c.l.b16 %v672
    %v737 = vunpack.c.l.b16 %v673
    %v738 = vunpack.c.l.b16 %v674
    %v739 = vunpack.c.l.b16 %v675
    %v740 = vunpack.c.l.b16 %v676
    %v741 = vunpack.c.l.b16 %v677
    %v742 = vunpack.c.l.b16 %v678
    %v743 = vunpack.c.l.b16 %v679
    %v744 = vunpack.c.l.b16 %v680
    %v745 = vunpack.c.l.b16 %v681
    %v746 = vunpack.c.l.b16 %v682
    %v747 = vunpack.c.l.b16 %v683
    %v748 = vunpack.c.l.b16 %v684
    %v749 = vunpack.c.l.b16 %v685
    %v750 = vunpack.c.l.b16 %v686
    %v751 = vunpack.c.l.b16 %v687
    %v752 = vunpack.c.l.b16 %v688
    %v753 = vunpack.c.l.b16 %v689
    %v754 = vunpack.c.l.b16 %v690
    %v755 = vpack.c.b16 %v724, %v723
    %v756 = vpack.c.b16 %v726, %v725
    %v757 = vpack.c.b16 %v728, %v727
    %v758 = vpack.c.b16 %v730, %v729
    %v759 = vpack.c.b16 %v732, %v731
    %v760 = vpack.c.b16 %v734, %v733
    %v761 = vpack.c.b16 %v736, %v735
    %v762 = vpack.c.b16 %v738, %v737
    %v763 = vpack.c.b16 %v740, %v739
    %v764 = vpack.c.b16 %v742, %v741
    %v765 = vpack.c.b16 %v744, %v743
    %v766 = vpack.c.b16 %v746, %v745
    %v767 = vpack.c.b16 %v748, %v747
    %v768 = vpack.c.b16 %v750, %v749
    %v769 = vpack.c.b16 %v752, %v751
    %v770 = vpack.c.b16 %v754, %v753
    %787 = vmatpush.bf16.msra.mxu0 %v762
    %788 = vmatpush.bf16.msra.mxu0 %v761
    %789 = vmatpush.bf16.msra.mxu0 %v760
    %790 = vmatpush.bf16.msra.mxu0 %v759
    %791 = vmatpush.bf16.msra.mxu0 %v758
    %792 = vmatpush.bf16.msra.mxu0 %v757
    %793 = vmatpush.bf16.msra.mxu0 %v756
    %794 = vmatpush.bf16.msra.mxu0 %v755
    %795 = vmatmul.bf16.gmra.mxu0 %v656
    %v796 = vpop.f32.mrf.mxu0
    %v797 = vadd.f32 %v658, %v796
    %v798 = vpop.f32.mrf.mxu0
    %v799 = vadd.f32 %v658, %v798
    %800 = vdwg.mxu0
    %801 = vmatpush.bf16.msra.mxu0 %v770
    %802 = vmatpush.bf16.msra.mxu0 %v769
    %803 = vmatpush.bf16.msra.mxu0 %v768
    %804 = vmatpush.bf16.msra.mxu0 %v767
    %805 = vmatpush.bf16.msra.mxu0 %v766
    %806 = vmatpush.bf16.msra.mxu0 %v765
    %807 = vmatpush.bf16.msra.mxu0 %v764
    %808 = vmatpush.bf16.msra.mxu0 %v763
    %809 = vmatmul.bf16.gmra.mxu0 %v657
    %v810 = vpop.f32.mrf.mxu0
    %v811 = vadd.f32 %v797, %v810
    %v812 = vpop.f32.mrf.mxu0
    %v813 = vadd.f32 %v799, %v812
    %814 = vdwg.mxu0
    %v815 = vtanh.pop %v811
    %v816 = vtanh.pop %v813
    %817 = vst [vmem:[#allocation11] sm:$0xff] %v815
    %818 = vst [vmem:[#allocation11 + $0x8] sm:$0xff] %v816
    // Predicated region
    $region42: #{tpu_custom_call.1} parent=1 // pred_check
      _
    $region43: #{tpu_custom_call.1} parent=1 // pred_check_branch
      %820 = sbr.rel (0) target = $region45
    $region44: #{tpu_custom_call.1} parent=1 // pred_region
      %822 = vsyncadd [#allocation4], 0
      %s823 = sshll.u32 [#allocation11], 4
      %s824 = int_to_ptr.vmem [resolvable:$true] %s823
      %s825 = sshll.u32 %s5, 4
      %s826 = int_to_ptr.hbm [resolvable:$true] %s825
      %831 = dma.vmem_to_hbm [thread:$0]  %s824, 256, %s826, [#allocation4], 128, 128, 8
    $region45: #{tpu_custom_call.1} parent=1 // pred_fallthru
      _
    // Predicated region
    $region46: #{tpu_custom_call.1} parent=1 // pred_check
      _
    $region47: #{tpu_custom_call.1} parent=1 // pred_check_branch
      %833 = sbr.rel (0) target = $region49
    $region48: #{tpu_custom_call.1} parent=1 // pred_region
      %835 = dma.done [#allocation4], 256
    $region49: #{tpu_custom_call.1} parent=1 // pred_fallthru
      _
    %836 = vsyncpa [#allocation3], 1
    %837 = vsyncpa [#allocation6], 1
    %838 = vsyncpa [#allocation9], 1
    %839 = vsyncpa [#allocation4], 1

</llo_original>
